<compile_context>
chip_gen: v7x
topology: tpu7x:2x2x1
jax: 0.10.0
libtpu: 0.0.40
codegen_flags: <defaults>
</compile_context>

<pallas_src>
import functools
import math

import jax
import jax.numpy as jnp
from jax.experimental import pallas as pl
from jax.experimental.pallas import tpu as pltpu

_LANE = 128
_SUBLANE = 8
_FULL_K_MAX = 4096  # keep K un-padded / single K block when in_features <= this


def _round_up(n, m):
    return ((n + m - 1) // m) * m


def _physical_vmem_bytes():
    try:
        return int(pltpu.get_tpu_info().vmem_capacity_bytes)
    except Exception:
        return 64 * 1024 * 1024  # conservative fallback (v7x per-TC VMEM)


def _largest_divisor_tile(dim, cap, base):
    """Largest multiple of `base` that divides `dim` and is <= cap."""
    best = base
    t = base
    limit = min(dim, cap)
    while t <= limit:
        if dim % t == 0:
            best = t
        t += base
    return best


def _plan(batch, in_features, out_features):
    """Single source of truth for padding + tiling (used by prepare & forward)."""
    phys = _physical_vmem_bytes()
    vmem_limit = min(phys * 3 // 4, 100 * 1024 * 1024)
    budget = vmem_limit // 2  # headroom for compiler-internal scratch

    dp = _round_up(out_features, _LANE)
    full_k = in_features <= _FULL_K_MAX
    kp = in_features if full_k else _round_up(in_features, _LANE)
    bp = _round_up(max(batch, 1), _SUBLANE)

    tm_cap, tn_cap, tk_cap = 1024, 1024, 2048
    while True:
        tm = _largest_divisor_tile(bp, tm_cap, _SUBLANE)
        tn = _largest_divisor_tile(dp, tn_cap, _LANE)
        tk = kp if full_k else _largest_divisor_tile(kp, tk_cap, _LANE)
        vmem = (2 * tm * tk * 4      # x tiles, f32, double-buffered
                + 2 * tk * tn * 2    # weight tiles, bf16, double-buffered
                + 2 * tm * tn * 4    # output tiles, f32, double-buffered
                + 2 * tn * 4)        # bias tile
        if vmem <= budget:
            break
        if (not full_k) and tk_cap > _LANE and tk_cap >= max(tm_cap, tn_cap):
            tk_cap //= 2
        elif tm_cap > _SUBLANE and tm_cap >= tn_cap:
            tm_cap = max(_SUBLANE, tm_cap // 2)
        elif tn_cap > _LANE:
            tn_cap //= 2
        else:
            break  # smallest tiles already; rely on vmem_limit
    return dict(bp=bp, kp=kp, dp=dp, tm=tm, tn=tn, tk=tk, vmem_limit=vmem_limit)


def _linear_kernel(x_ref, w_ref, b_ref, o_ref):
    """One (tm, tn) output tile; K-reduction over grid axis 2.

    x_ref: (tm, tk) f32 activations (cast to bf16 for the MXU)
    w_ref: (tk, tn) bf16 weight in canonical [K, N] layout
    b_ref: (1, tn)  f32 bias
    o_ref: (tm, tn) f32 output tile, resident across the K axis (accumulator).
    """
    k = pl.program_id(2)

    @pl.when(k == 0)
    def _():
        o_ref[...] = jnp.zeros_like(o_ref)

    o_ref[...] += jnp.dot(
        x_ref[...].astype(jnp.bfloat16),
        w_ref[...],
        preferred_element_type=jnp.float32,
    )

    @pl.when(k == pl.num_programs(2) - 1)
    def _():
        o_ref[...] += b_ref[...]  # bias added exactly once


def prepare_params(weight, bias):
    """One-time param prep: pad out/in features, transpose to (Kp, Dp), cast bf16."""
    out_features, in_features = weight.shape
    p = _plan(1, in_features, out_features)
    kp, dp = p["kp"], p["dp"]
    w = jnp.pad(weight, ((0, dp - out_features), (0, kp - in_features)))
    w_pad = jnp.transpose(w).astype(jnp.bfloat16)                      # (Kp, Dp)
    b_pad = jnp.pad(bias, (0, dp - out_features)).reshape(1, dp).astype(jnp.float32)
    return w_pad, b_pad


@functools.partial(jax.jit, static_argnames=("out_features",))
def my_layer_forward(x, w_pad, b_pad, *, out_features):
    """Pallas equivalent of MyLayer.forward.

    x: (batch, in_features) f32; w_pad/b_pad from prepare_params.
    Returns (batch, out_features) f32.
    """
    batch, in_features = x.shape
    kp, dp = w_pad.shape
    p = _plan(batch, in_features, out_features)
    assert (p["kp"], p["dp"]) == (kp, dp), "params not prepared with prepare_params"
    bp, tm, tn, tk = p["bp"], p["tm"], p["tn"], p["tk"]

    if (bp, kp) != (batch, in_features):
        x = jnp.pad(x, ((0, bp - batch), (0, kp - in_features)))

    grid = (bp // tm, dp // tn, kp // tk)

    out_padded = pl.pallas_call(
        _linear_kernel,
        out_shape=jax.ShapeDtypeStruct((bp, dp), jnp.float32),
        grid=grid,
        in_specs=[
            pl.BlockSpec((tm, tk), lambda i, j, k: (i, k)),   # x tile
            pl.BlockSpec((tk, tn), lambda i, j, k: (k, j)),   # weight tile [K, N]
            pl.BlockSpec((1, tn), lambda i, j, k: (0, j)),    # bias tile
        ],
        out_specs=pl.BlockSpec((tm, tn), lambda i, j, k: (i, j)),
        compiler_params=pltpu.CompilerParams(
            dimension_semantics=("parallel", "parallel", "arbitrary"),
            vmem_limit_bytes=p["vmem_limit"],
        ),
    )(x, w_pad, b_pad)

    return out_padded[:batch, :out_features]


if __name__ == "__main__":
    # Shapes implied by MyLayer(independent, dependent).
    independent = 32   # input features
    dependent = 16     # output features
    batch = 8

    key = jax.random.PRNGKey(0)
    k_x, k_w, k_b = jax.random.split(key, 3)

    x = jax.random.normal(k_x, (batch, independent), dtype=jnp.float32)

    # Deterministic init matching the module's __init__:
    #   weight ~ U(-0.5, 0.5);  bias ~ U(-1/sqrt(in), 1/sqrt(in)) (Linear default)
    weight = jax.random.uniform(
        k_w, (dependent, independent), dtype=jnp.float32, minval=-0.5, maxval=0.5
    )
    bound = 1.0 / math.sqrt(independent)
    bias = jax.random.uniform(
        k_b, (dependent,), dtype=jnp.float32, minval=-bound, maxval=bound
    )

    w_pad, b_pad = prepare_params(weight, bias)

    out = my_layer_forward(x, w_pad, b_pad, out_features=dependent)
    out = jax.block_until_ready(out)

    # Reference (f32); bf16 MXU path => loosened tolerance.
    ref = x @ weight.T + bias
    assert out.shape == (batch, dependent)
    assert jnp.allclose(out, ref, atol=5e-2, rtol=5e-2), (
        float(jnp.max(jnp.abs(out - ref)))
    )

    print("KERNEL_OK")
</pallas_src>

<mosaic_0001>
module attributes {stable_mosaic.version = 11 : i64} {
  func.func @_linear_kernel(%arg0: i32, %arg1: i32, %arg2: i32, %arg3: memref<8x32xf32, #tpu.memory_space<vmem>>, %arg4: memref<32x128xbf16, #tpu.memory_space<vmem>>, %arg5: memref<1x128xf32, #tpu.memory_space<vmem>>, %arg6: memref<8x128xf32, #tpu.memory_space<vmem>>) attributes {dimension_semantics = [#tpu.dimension_semantics<parallel>, #tpu.dimension_semantics<parallel>, #tpu.dimension_semantics<arbitrary>], iteration_bounds = array<i64: 1, 1, 1>, scalar_prefetch = 0 : i64, scratch_operands = 0 : i64, tpu.core_type = #tpu.core_type<tc>, window_params = [{transform_indices = @transform_0, window_bounds = array<i64: 8, 32>}, {transform_indices = @transform_1, window_bounds = array<i64: 32, 128>}, {transform_indices = @transform_2, window_bounds = array<i64: 1, 128>}, {transform_indices = @transform_3, window_bounds = array<i64: 8, 128>}]} {
    %c0_i32 = arith.constant 0 : i32
    %0 = arith.cmpi eq, %arg2, %c0_i32 : i32
    %1 = arith.extui %0 : i1 to i32
    %c0_i32_0 = arith.constant 0 : i32
    %2 = arith.cmpi ne, %1, %c0_i32_0 : i32
    scf.if %2 {
      %cst_10 = arith.constant 0.000000e+00 : f32
      %13 = vector.broadcast %cst_10 : f32 to vector<8x128xf32>
      %c0_11 = arith.constant 0 : index
      %c0_12 = arith.constant 0 : index
      %14 = vector.load %arg6[%c0_11, %c0_12] : memref<8x128xf32, #tpu.memory_space<vmem>>, vector<8x128xf32>
      tpu.vector_store %arg6[%c0_11, %c0_12], %13 {strides = array<i32>} : memref<8x128xf32, #tpu.memory_space<vmem>>, vector<8x128xf32>,
    } else {
    }
    %c0 = arith.constant 0 : index
    %c0_1 = arith.constant 0 : index
    %3 = vector.load %arg6[%c0, %c0_1] : memref<8x128xf32, #tpu.memory_space<vmem>>, vector<8x128xf32>
    %c0_2 = arith.constant 0 : index
    %c0_3 = arith.constant 0 : index
    %4 = vector.load %arg3[%c0_2, %c0_3] : memref<8x32xf32, #tpu.memory_space<vmem>>, vector<8x32xf32>
    %5 = arith.truncf %4 : vector<8x32xf32> to vector<8x32xbf16>
    %c0_4 = arith.constant 0 : index
    %c0_5 = arith.constant 0 : index
    %6 = vector.load %arg4[%c0_4, %c0_5] : memref<32x128xbf16, #tpu.memory_space<vmem>>, vector<32x128xbf16>
    %cst = arith.constant dense<0.000000e+00> : vector<8x128xf32>
    %7 = tpu.matmul %5, %6, %cst {dimension_numbers = #tpu.dot_dimension_numbers<[1], [0], [0], [1], [0, 0, 1, 1], [], []>} : vector<8x32xbf16>, vector<32x128xbf16>, vector<8x128xf32> -> vector<8x128xf32>
    %8 = arith.addf %3, %7 : vector<8x128xf32>
    %c0_6 = arith.constant 0 : index
    %c0_7 = arith.constant 0 : index
    %9 = vector.load %arg6[%c0_6, %c0_7] : memref<8x128xf32, #tpu.memory_space<vmem>>, vector<8x128xf32>
    tpu.vector_store %arg6[%c0_6, %c0_7], %8 {strides = array<i32>} : memref<8x128xf32, #tpu.memory_space<vmem>>, vector<8x128xf32>,
    %c0_i32_8 = arith.constant 0 : i32
    %10 = arith.cmpi eq, %arg2, %c0_i32_8 : i32
    %11 = arith.extui %10 : i1 to i32
    %c0_i32_9 = arith.constant 0 : i32
    %12 = arith.cmpi ne, %11, %c0_i32_9 : i32
    scf.if %12 {
      %c0_10 = arith.constant 0 : index
      %c0_11 = arith.constant 0 : index
      %13 = vector.load %arg6[%c0_10, %c0_11] : memref<8x128xf32, #tpu.memory_space<vmem>>, vector<8x128xf32>
      %c0_12 = arith.constant 0 : index
      %c0_13 = arith.constant 0 : index
      %14 = vector.load %arg5[%c0_12, %c0_13] : memref<1x128xf32, #tpu.memory_space<vmem>>, vector<1x128xf32>
      %15 = vector.broadcast %14 : vector<1x128xf32> to vector<8x128xf32>
      %16 = arith.addf %13, %15 : vector<8x128xf32>
      %c0_14 = arith.constant 0 : index
      %c0_15 = arith.constant 0 : index
      %17 = vector.load %arg6[%c0_14, %c0_15] : memref<8x128xf32, #tpu.memory_space<vmem>>, vector<8x128xf32>
      tpu.vector_store %arg6[%c0_14, %c0_15], %16 {strides = array<i32>} : memref<8x128xf32, #tpu.memory_space<vmem>>, vector<8x128xf32>,
    } else {
    }
    return
  }
  func.func @transform_0(%arg0: i32, %arg1: i32, %arg2: i32) -> (i32, i32) {
    %c0_i32 = arith.constant 0 : i32
    return %arg0, %arg2 : i32, i32
  }
  func.func @transform_1(%arg0: i32, %arg1: i32, %arg2: i32) -> (i32, i32) {
    %c0_i32 = arith.constant 0 : i32
    return %arg2, %arg1 : i32, i32
  }
  func.func @transform_2(%arg0: i32, %arg1: i32, %arg2: i32) -> (i32, i32) {
    %c0_i32 = arith.constant 0 : i32
    %c0_i32_0 = arith.constant 0 : i32
    return %c0_i32, %arg1 : i32, i32
  }
  func.func @transform_3(%arg0: i32, %arg1: i32, %arg2: i32) -> (i32, i32) {
    %c0_i32 = arith.constant 0 : i32
    return %arg0, %arg1 : i32, i32
  }
}

</mosaic_0001>

<llo_original>
// kernel: my_layer_forward.1
$region0: #{my_layer_forward.1}
  #allocation0 [shape = 'u32[]', space=smem, size = 0x4, offset = 0x4, fixed_abs, tag = 'smem constant byte address 0x4 - core index']
  #allocation1 [shape = 'u32[144,128]{1,0:T(1,128)}', space=vmem, size = 0x12000, scoped, tag = 'internal scratch']
  %s0 = inlined_call_operand.hbm [shape: f32[8,32], index: 0, kind: input, shape index: {}]
  %s1 = inlined_call_operand.hbm [shape: bf16[32,128], index: 1, kind: input, shape index: {}]
  %s2 = inlined_call_operand.vmem [shape: f32[1,128], index: 2, kind: input, shape index: {}]
  %s3 = inlined_call_operand.hbm [shape: f32[8,128], index: 3, kind: output, shape index: {}]
  %s4 = sld [smem:[#allocation0]]
  $region38: #{my_layer_forward.1} parent=0
    _
  %s6 = ssub.s32 1, %s4
  %s7 = scalar_select 0, %s6, %s4
  $region1: #{my_layer_forward.1} parent=0
    #allocation2 [shape = 'u8[4096]{0}', space=vmem, size = 0x1000, scoped, tag = 'input window, operand 0, single buffered']
    #allocation3 [shape = 's32[1]{0}', space=sflag, size = 0x4, scoped, tag = 'scoped memory for my_layer_forward.1']
    #allocation4 [shape = 's32[1]{0}', space=sflag, size = 0x4, scoped, tag = 'scoped memory for my_layer_forward.1']
    #allocation5 [shape = 'u8[8192]{0}', space=vmem, size = 0x2000, scoped, tag = 'input window, operand 1, single buffered']
    #allocation6 [shape = 's32[1]{0}', space=sflag, size = 0x4, scoped, tag = 'scoped memory for my_layer_forward.1']
    #allocation7 [shape = 'u8[4096]{0}', space=vmem, size = 0x1000, scoped, tag = 'output window, operand 0, single buffered']
    %8 = vsyncpa [#allocation3], 0
    %9 = vsyncpa [#allocation6], 0
    %10 = vsyncpa [#allocation4], 0
    // Predicated region
    $region2: #{my_layer_forward.1} parent=1 // pred_check
      _
    $region3: #{my_layer_forward.1} parent=1 // pred_check_branch
      %12 = sbr.rel (0) target = $region5
    $region4: #{my_layer_forward.1} parent=1 // pred_region
      %s14 = ssub.s32 128, 128
      %15 = vsyncadd [#allocation3], %s14
      %s17 = sshll.u32 [#allocation2], 4
      %s18 = int_to_ptr.vmem [resolvable:$true] %s17
      %20 = dma.hbm_to_vmem [thread:$0]  %s0, 128, %s18, [#allocation3]
    $region5: #{my_layer_forward.1} parent=1 // pred_fallthru
      _
    // Predicated region
    $region6: #{my_layer_forward.1} parent=1 // pred_check
      _
    $region7: #{my_layer_forward.1} parent=1 // pred_check_branch
      %22 = sbr.rel (0) target = $region9
    $region8: #{my_layer_forward.1} parent=1 // pred_region
      %s24 = ssub.s32 256, 256
      %25 = vsyncadd [#allocation6], %s24
      %s26 = sshll.u32 [#allocation5], 4
      %s27 = int_to_ptr.vmem [resolvable:$true] %s26
      %32 = dma.hbm_to_vmem [thread:$0]  %s1, 256, %s27, [#allocation6], 64, 64, 4
    $region9: #{my_layer_forward.1} parent=1 // pred_fallthru
      _
    // Predicated region
    $region10: #{my_layer_forward.1} parent=1 // pred_check
      _
    $region11: #{my_layer_forward.1} parent=1 // pred_check_branch
      %34 = sbr.rel (0) target = $region13
    $region12: #{my_layer_forward.1} parent=1 // pred_region
      _
    $region13: #{my_layer_forward.1} parent=1 // pred_fallthru
      _
    // Predicated region
    $region14: #{my_layer_forward.1} parent=1 // pred_check
      _
    $region15: #{my_layer_forward.1} parent=1 // pred_check_branch
      %36 = sbr.rel (0) target = $region17
    $region16: #{my_layer_forward.1} parent=1 // pred_region
      %37 = dma.done [#allocation3], 128
    $region17: #{my_layer_forward.1} parent=1 // pred_fallthru
      _
    // Predicated region
    $region18: #{my_layer_forward.1} parent=1 // pred_check
      _
    $region19: #{my_layer_forward.1} parent=1 // pred_check_branch
      %39 = sbr.rel (0) target = $region21
    $region20: #{my_layer_forward.1} parent=1 // pred_region
      %40 = dma.done [#allocation6], 256
    $region21: #{my_layer_forward.1} parent=1 // pred_fallthru
      _
    %p42 = scmp.eq.s32.totalorder 0, 0
    // Predicated region
    $region22: #{my_layer_forward.1} parent=1 // pred_check
      %p43 = pneg %p42
    $region23: #{my_layer_forward.1} parent=1 // pred_check_branch
      %45 = sbr.rel (%p43) target = $region25
    $region24: #{my_layer_forward.1} parent=1 // pred_region
      %46 = vst [vmem:[#allocation7] sm:$0xff] 0.0
    $region25: #{my_layer_forward.1} parent=1 // pred_fallthru
      _
    %v47 = vld [vmem:[#allocation7] sm:$0xff]
    %v48 = vld [vmem:[#allocation2] sm:$0xff]
    %v49 = vpack.c.bf16 %v48, %v48
    %v50 = vld [vmem:[#allocation5] sm:$0xf]
    %v51 = vld [vmem:[#allocation5 + $0x4] sm:$0xf]
    %v52 = vld [vmem:[#allocation5 + $0x8] sm:$0xf]
    %v53 = vld [vmem:[#allocation5 + $0xc] sm:$0xf]
    %v58 = vunpack.c.l.b16 %v50
    %v59 = vunpack.c.l.b16 %v51
    %v60 = vunpack.c.l.b16 %v52
    %v61 = vunpack.c.l.b16 %v53
    %v62 = vpack.c.b16 %v59, %v58
    %v63 = vpack.c.b16 %v61, %v60
    %vm66 = vcmask 261120
    %v68 = vsel %vm66, %v49, 0
    %70 = vmatprep.subr.bf16.mxu0 0
    %71 = vmatpush1.bf16.msra.mxu0 %v62
    %72 = vmatprep.subr.bf16.mxu0 0
    %73 = vmatpush1.bf16.msra.mxu0 %v63
    %74 = vmatprep.subr.bf16.mxu0 0
    %75 = vmatpush1.bf16.msra.mxu0 0
    %76 = vmatprep.subr.bf16.mxu0 0
    %77 = vmatpush1.bf16.msra.mxu0 0
    %78 = vmatprep.subr.bf16.mxu0 0
    %79 = vmatpush1.bf16.msra.mxu0 0
    %80 = vmatprep.subr.bf16.mxu0 0
    %81 = vmatpush1.bf16.msra.mxu0 0
    %82 = vmatprep.subr.bf16.mxu0 0
    %83 = vmatpush1.bf16.msra.mxu0 0
    %84 = vmatprep.subr.bf16.mxu0 0
    %85 = vmatpush1.bf16.msra.mxu0 0
    %86 = vmatprep.subr.bf16.mxu0 0
    %87 = vmatpush1.bf16.msra.mxu0 0
    %88 = vmatprep.subr.bf16.mxu0 0
    %89 = vmatpush1.bf16.msra.mxu0 0
    %90 = vmatprep.subr.bf16.mxu0 0
    %91 = vmatpush1.bf16.msra.mxu0 0
    %92 = vmatprep.subr.bf16.mxu0 0
    %93 = vmatpush1.bf16.msra.mxu0 0
    %94 = vmatprep.subr.bf16.mxu0 0
    %95 = vmatpush1.bf16.msra.mxu0 0
    %96 = vmatprep.subr.bf16.mxu0 0
    %97 = vmatpush1.bf16.msra.mxu0 0
    %98 = vmatprep.subr.bf16.mxu0 0
    %99 = vmatpush1.bf16.msra.mxu0 0
    %100 = vmatprep.subr.bf16.mxu0 0
    %101 = vmatpush1.bf16.msra.mxu0 0
    %102 = vmatprep.mubr.bf16.mxu0 0
    %103 = vmatmul.mubr.bf16.gmra.mrb[0].mxu0 %v68
    %v104 = vpop.f32.mrb[0].mxu0
    %v105 = vadd.f32 0.0, %v104
    %v106 = vpop.f32.mrb[0].mxu0
    %v107 = vpop.f32.mrb[0].mxu0
    %v108 = vpop.f32.mrb[0].mxu0
    %109 = vdwg.mxu0
    %v110 = vadd.f32 %v47, %v105
    %111 = vst [vmem:[#allocation7] sm:$0xff] %v110
    // Predicated region
    $region26: #{my_layer_forward.1} parent=1 // pred_check
      %p112 = pneg %p42
    $region27: #{my_layer_forward.1} parent=1 // pred_check_branch
      %114 = sbr.rel (%p112) target = $region29
    $region28: #{my_layer_forward.1} parent=1 // pred_region
      %v115 = vld [vmem:[#allocation7] sm:$0xff]
      %v116 = vld [vmem:[%s2] sm:$0x1]
      %v118 = vlaneseq
      %v119 = vshrl.u32 %v118, 7
      %v120 = vsub.s32 0, %v119
      %v121 = vrot.slane %v116, %v120
      %v123 = vadd.f32 %v115, %v121
      %124 = vst [vmem:[#allocation7] sm:$0xff] %v123
    $region29: #{my_layer_forward.1} parent=1 // pred_fallthru
      _
    // Predicated region
    $region30: #{my_layer_forward.1} parent=1 // pred_check
      _
    $region31: #{my_layer_forward.1} parent=1 // pred_check_branch
      %126 = sbr.rel (0) target = $region33
    $region32: #{my_layer_forward.1} parent=1 // pred_region
      %s128 = ssub.s32 128, 128
      %129 = vsyncadd [#allocation4], %s128
      %s131 = sshll.u32 [#allocation7], 4
      %s132 = int_to_ptr.vmem [resolvable:$true] %s131
      %134 = dma.vmem_to_hbm [thread:$0]  %s132, 128, %s3, [#allocation4]
    $region33: #{my_layer_forward.1} parent=1 // pred_fallthru
      _
    // Predicated region
    $region34: #{my_layer_forward.1} parent=1 // pred_check
      _
    $region35: #{my_layer_forward.1} parent=1 // pred_check_branch
      %136 = sbr.rel (0) target = $region37
    $region36: #{my_layer_forward.1} parent=1 // pred_region
      %137 = dma.done [#allocation4], 128
    $region37: #{my_layer_forward.1} parent=1 // pred_fallthru
      _
    %138 = vsyncpa [#allocation3], 1
    %139 = vsyncpa [#allocation6], 1
    %140 = vsyncpa [#allocation4], 1

</llo_original>
